<compile_context>
chip_gen: v7x
topology: tpu7x:2x2x1
jax: 0.10.0
libtpu: 0.0.40
codegen_flags: <defaults>
</compile_context>

<pallas_src>
import jax
import jax.numpy as jnp
from jax import lax
from jax.experimental import pallas as pl
from jax.experimental.pallas import tpu as pltpu


# ---------------------------------------------------------------------------
# Kernels
# ---------------------------------------------------------------------------

def _make_fused_kernel(bt, hw, inv_hw):
    """Fused pool -> MLP -> scale over bt images per grid step."""

    def kernel(x_ref, w1t_ref, b1c_ref, w2t_ref, b2c_ref, o_ref):
        # x_ref/o_ref: (bt, C, HW); w1t: (Cr, C); b1c: (Cr, 1); w2t: (C, Cr); b2c: (C, 1)
        ones = jnp.ones((hw, 1), x_ref.dtype)          # hoisted MXU row-sum operand
        for b in range(bt):                            # bt is small (capped) -> unrolled
            # Global average pool on the MXU: row sums via ones column, f32 accum.
            pooled = jnp.dot(x_ref[b], ones,
                             preferred_element_type=jnp.float32) * inv_hw      # (C, 1)
            # Channel MLP in column form (no reshapes / relayouts needed).
            h = jnp.maximum(
                jnp.dot(w1t_ref[...], pooled,
                        preferred_element_type=jnp.float32) + b1c_ref[...], 0.0)  # (Cr, 1)
            s = jax.nn.sigmoid(
                jnp.dot(w2t_ref[...], h,
                        preferred_element_type=jnp.float32) + b2c_ref[...])       # (C, 1)
            # Second streamed read of x_ref (no big bound block value kept live).
            o_ref[b] = (x_ref[b] * s.astype(x_ref.dtype)).astype(o_ref.dtype)

    return kernel


def _make_pool_gate_kernel(bt, hw, hw_tile, inv_hw):
    """HW-tiled accumulating pool; the channel MLP is fused into the finalize."""
    ragged = (hw % hw_tile) != 0

    def kernel(x_ref, w1t_ref, b1c_ref, w2t_ref, b2c_ref, gate_ref):
        # x_ref: (bt, C, hw_tile); gate_ref: (bt, C, 1) f32 (resident accumulator -> gate)
        t = pl.program_id(1)

        @pl.when(t == 0)
        def _():
            gate_ref[...] = jnp.zeros_like(gate_ref)

        ones = jnp.ones((hw_tile, 1), x_ref.dtype)
        for b in range(bt):
            xb = x_ref[b]                                              # (C, hw_tile)
            if ragged:
                col = lax.broadcasted_iota(jnp.int32, xb.shape, 1)
                xb = jnp.where(t * hw_tile + col < hw, xb, jnp.zeros_like(xb))
            gate_ref[b] += jnp.dot(xb, ones,
                                   preferred_element_type=jnp.float32)  # partial sum

        @pl.when(t == pl.num_programs(1) - 1)
        def _():
            # Finalize: tiny channel MLP hides entirely under the pool DMA.
            for b in range(bt):
                pooled = gate_ref[b] * inv_hw                                    # (C, 1)
                h = jnp.maximum(
                    jnp.dot(w1t_ref[...], pooled,
                            preferred_element_type=jnp.float32) + b1c_ref[...], 0.0)
                s = jax.nn.sigmoid(
                    jnp.dot(w2t_ref[...], h,
                            preferred_element_type=jnp.float32) + b2c_ref[...])
                gate_ref[b] = s

    return kernel


def _scale_kernel(x_ref, gate_ref, o_ref):
    # x_ref/o_ref: (bt, C, hw_tile); gate_ref: (bt, C, 1) f32 -> broadcast over lanes.
    o_ref[...] = (x_ref[...] * gate_ref[...]).astype(o_ref.dtype)


# ---------------------------------------------------------------------------
# Sizing helpers
# ---------------------------------------------------------------------------

_FUSED_TARGET_BYTES = 2 * 1024 * 1024    # per-step block target (amortizes ~0.35us/step)
_MIN_STEP_BYTES = 512 * 1024             # never shrink steps below this (v5e/v6e safe)
_SPLIT_TARGET_BYTES = 4 * 1024 * 1024    # per-step x block target in the split path


def _scoped_vmem_limit_bytes():
    """Scoped-VMEM limit: half of physical VMEM, capped at 96 MiB."""
    cap = None
    try:
        info = pltpu.get_tpu_info()
        cap = getattr(info, "vmem_capacity_bytes", None)
    except Exception:
        cap = None
    if not cap:
        cap = 64 * 1024 * 1024           # conservative: v7x per-TensorCore VMEM
    return int(min(cap // 2, 96 * 1024 * 1024))


def _largest_divisor_leq(n, cap):
    cap = max(1, min(n, int(cap)))
    for d in range(cap, 0, -1):
        if n % d == 0:
            return d
    return 1


def _pick_bt_fused(B, image_bytes, usable):
    """Images per fused grid step, or None if one image doesn't fit VMEM."""
    if 4 * image_bytes > usable:          # in + out blocks, each double-buffered
        return None
    cap = min(B, 16,                      # 16 bounds the in-kernel unroll
              max(1, _FUSED_TARGET_BYTES // max(image_bytes, 1)),
              max(1, usable // (4 * image_bytes)))
    bt = _largest_divisor_leq(B, cap)
    # Prefer >= ~8 grid steps (deeper pipelining / both v7x cores), but only
    # while each step still moves >= _MIN_STEP_BYTES (don't pessimize 1-TC parts).
    while B // bt < 8 and bt > 1:
        smaller = _largest_divisor_leq(B, bt - 1)
        if smaller * image_bytes < _MIN_STEP_BYTES:
            break
        bt = smaller
    return bt


def _pick_hw_tile(hw, c, itemsize, usable):
    """Lane-dense HW tile (multiple of 128, or full HW) for the split path."""
    if hw <= 128:
        return hw
    row_bytes = max(c * itemsize, 1)
    cap = max(128, min(usable // (4 * row_bytes), _SPLIT_TARGET_BYTES // row_bytes))
    tile = (min(cap, hw) // 128) * 128
    if tile >= hw:
        return hw
    return max(tile, 128)


def _round_hw_tile(hw_tile, hw):
    if hw_tile >= hw or hw <= 128:
        return hw
    return max(128, (hw_tile // 128) * 128)


# ---------------------------------------------------------------------------
# Forward wrapper (NCHW interface, matching the PyTorch module)
# ---------------------------------------------------------------------------

def se_forward(x_nchw, w1, b1, w2, b2, *, force_split=False, hw_tile=None,
               donate_x=False):
    """SE forward.

    x_nchw: (B, C, H, W).  w1: (C, Cr), b1: (1, Cr), w2: (Cr, C), b2: (1, C)
    (w1/w2 are the 1x1-conv weights with the trailing 1x1 squeezed and
    transposed so that pooled @ w1 == conv1(pooled)).
    """
    B, C, H, W = x_nchw.shape
    HW = H * W
    Cr = w1.shape[1]
    dtype = x_nchw.dtype
    itemsize = jnp.dtype(dtype).itemsize

    # NCHW-native flat view: (B, C, HW).  Pure view -> zero HBM traffic.
    x3 = x_nchw.reshape(B, C, HW)

    # Transposed weights / column biases for the in-kernel column-form MLP
    # (tiny host-side ops on (C, Cr)-sized arrays).
    w1t = jnp.transpose(w1)              # (Cr, C)
    b1c = jnp.reshape(b1, (Cr, 1))       # (Cr, 1)
    w2t = jnp.transpose(w2)              # (C, Cr)
    b2c = jnp.reshape(b2, (C, 1))        # (C, 1)

    scoped_vmem = _scoped_vmem_limit_bytes()
    usable = max(scoped_vmem - 4 * 1024 * 1024, 2 * 1024 * 1024)
    image_bytes = C * HW * itemsize      # dtype-aware: bf16 keeps more shapes fused

    def _cparams(sem):
        return pltpu.CompilerParams(dimension_semantics=sem,
                                    vmem_limit_bytes=scoped_vmem)

    bt = None if force_split else _pick_bt_fused(B, image_bytes, usable)

    if bt is not None:
        # ----- Fused single-pass path -------------------------------------
        out3 = pl.pallas_call(
            _make_fused_kernel(bt, HW, 1.0 / HW),
            out_shape=jax.ShapeDtypeStruct((B, C, HW), dtype),
            grid_spec=pltpu.PrefetchScalarGridSpec(
                num_scalar_prefetch=0,
                grid=(B // bt,),
                in_specs=[
                    pl.BlockSpec((bt, C, HW), lambda g: (g, 0, 0)),   # x
                    pl.BlockSpec((Cr, C), lambda g: (0, 0)),          # w1^T
                    pl.BlockSpec((Cr, 1), lambda g: (0, 0)),          # b1 col
                    pl.BlockSpec((C, Cr), lambda g: (0, 0)),          # w2^T
                    pl.BlockSpec((C, 1), lambda g: (0, 0)),           # b2 col
                ],
                out_specs=pl.BlockSpec((bt, C, HW), lambda g: (g, 0, 0)),
            ),
            compiler_params=_cparams(("parallel",)),
            input_output_aliases=({0: 0} if donate_x else {}),
        )(x3, w1t, b1c, w2t, b2c)
    else:
        # ----- Split path: tiled pool(+MLP finalize) then tiled scale -------
        if hw_tile is None:
            hw_tile = _pick_hw_tile(HW, C, itemsize, usable)
        else:
            hw_tile = _round_hw_tile(int(hw_tile), HW)
        n_hw = pl.cdiv(HW, hw_tile)      # cdiv grid; ragged last tile is masked
        block_bytes = C * hw_tile * itemsize
        bt_sp = _largest_divisor_leq(B, min(B, 8, max(1, usable // (4 * block_bytes))))

        # TODO(synk): for B == 1 on dual-TensorCore parts, split the HW
        # reduction into per-core partial sums combined in the finalize.

        gate = pl.pallas_call(
            _make_pool_gate_kernel(bt_sp, HW, hw_tile, 1.0 / HW),
            out_shape=jax.ShapeDtypeStruct((B, C, 1), jnp.float32),
            grid_spec=pltpu.PrefetchScalarGridSpec(
                num_scalar_prefetch=0,
                grid=(B // bt_sp, n_hw),
                in_specs=[
                    pl.BlockSpec((bt_sp, C, hw_tile), lambda g, t: (g, 0, t)),  # x
                    pl.BlockSpec((Cr, C), lambda g, t: (0, 0)),
                    pl.BlockSpec((Cr, 1), lambda g, t: (0, 0)),
                    pl.BlockSpec((C, Cr), lambda g, t: (0, 0)),
                    pl.BlockSpec((C, 1), lambda g, t: (0, 0)),
                ],
                out_specs=pl.BlockSpec((bt_sp, C, 1), lambda g, t: (g, 0, 0)),
            ),
            compiler_params=_cparams(("parallel", "arbitrary")),
        )(x3, w1t, b1c, w2t, b2c)

        out3 = pl.pallas_call(
            _scale_kernel,
            out_shape=jax.ShapeDtypeStruct((B, C, HW), dtype),
            grid_spec=pltpu.PrefetchScalarGridSpec(
                num_scalar_prefetch=0,
                grid=(B // bt_sp, n_hw),
                in_specs=[
                    pl.BlockSpec((bt_sp, C, hw_tile), lambda g, t: (g, 0, t)),  # x
                    pl.BlockSpec((bt_sp, C, 1), lambda g, t: (g, 0, 0)),        # gate
                ],
                out_specs=pl.BlockSpec((bt_sp, C, hw_tile), lambda g, t: (g, 0, t)),
            ),
            compiler_params=_cparams(("parallel", "parallel")),
            input_output_aliases=({0: 0} if donate_x else {}),
        )(x3, gate)

    return out3.reshape(B, C, H, W)


# ---------------------------------------------------------------------------
# Pure-JAX reference
# ---------------------------------------------------------------------------

def se_reference(x_nchw, w1, b1, w2, b2):
    pooled = jnp.mean(x_nchw.astype(jnp.float32), axis=(2, 3))     # (B, C)
    h = jnp.maximum(pooled @ w1 + b1, 0.0)                         # (B, Cr)
    s = jax.nn.sigmoid(h @ w2 + b2)                                # (B, C)
    return x_nchw.astype(jnp.float32) * s[:, :, None, None]


if __name__ == "__main__":
    B, C, H, W, r = 2, 32, 16, 16, 8
    Cr = C // r

    key = jax.random.PRNGKey(0)
    kx, k1, kb1, k2, kb2 = jax.random.split(key, 5)

    x = jax.random.normal(kx, (B, C, H, W), dtype=jnp.float32)
    # Conv2d 1x1 == dense over channels; synthetic deterministic weights.
    w1 = jax.random.normal(k1, (C, Cr), dtype=jnp.float32) * 0.1
    b1 = jax.random.normal(kb1, (1, Cr), dtype=jnp.float32) * 0.1
    w2 = jax.random.normal(k2, (Cr, C), dtype=jnp.float32) * 0.1
    b2 = jax.random.normal(kb2, (1, C), dtype=jnp.float32) * 0.1

    ref = se_reference(x, w1, b1, w2, b2)

    # 1) Fused single-pass path (auto-selected at these shapes).
    out = se_forward(x, w1, b1, w2, b2)
    jax.block_until_ready(out)
    assert out.shape == (B, C, H, W)
    assert jnp.allclose(out, ref, atol=1e-4, rtol=1e-4)

    # 2) Split pool(+MLP finalize) / scale fallback path (forced, HW tiled 2x).
    out_split = se_forward(x, w1, b1, w2, b2, force_split=True, hw_tile=128)
    jax.block_until_ready(out_split)
    assert jnp.allclose(out_split, ref, atol=1e-4, rtol=1e-4)

    # 3) Ragged HW (144 not a multiple of 128): masked last tile in the split
    #    path, full-extent (legal) block in the fused path.
    x_r = jax.random.normal(kx, (B, C, 12, 12), dtype=jnp.float32)
    ref_r = se_reference(x_r, w1, b1, w2, b2)
    out_r_split = se_forward(x_r, w1, b1, w2, b2, force_split=True, hw_tile=128)
    jax.block_until_ready(out_r_split)
    assert jnp.allclose(out_r_split, ref_r, atol=1e-4, rtol=1e-4)
    out_r_fused = se_forward(x_r, w1, b1, w2, b2)
    jax.block_until_ready(out_r_fused)
    assert jnp.allclose(out_r_fused, ref_r, atol=1e-4, rtol=1e-4)

    # 4) bf16 activations (f32 accumulation; gate cast to bf16 pre-multiply is a
    #    deliberate precision trade).  donate_x exercises input/output aliasing.
    xb = x.astype(jnp.bfloat16)
    ref_bf16 = se_reference(xb, w1, b1, w2, b2)
    out_bf16 = se_forward(xb, w1, b1, w2, b2, donate_x=True)
    jax.block_until_ready(out_bf16)
    assert jnp.allclose(out_bf16.astype(jnp.float32), ref_bf16,
                        atol=2e-2, rtol=2e-2)

    print("KERNEL_OK")
</pallas_src>

<mosaic_0001>
module attributes {stable_mosaic.version = 11 : i64} {
  func.func @kernel(%arg0: i32, %arg1: memref<2x32x256xf32, #tpu.memory_space<vmem>>, %arg2: memref<4x32xf32, #tpu.memory_space<vmem>>, %arg3: memref<4x1xf32, #tpu.memory_space<vmem>>, %arg4: memref<32x4xf32, #tpu.memory_space<vmem>>, %arg5: memref<32x1xf32, #tpu.memory_space<vmem>>, %arg6: memref<2x32x256xf32, #tpu.memory_space<vmem>>) attributes {dimension_semantics = [#tpu.dimension_semantics<parallel>], iteration_bounds = array<i64: 1>, scalar_prefetch = 0 : i64, scratch_operands = 0 : i64, tpu.core_type = #tpu.core_type<tc>, window_params = [{transform_indices = @transform_0, window_bounds = array<i64: 2, 32, 256>}, {pipeline_mode = #tpu.pipeline_mode<synchronous>, transform_indices = @transform_1, window_bounds = array<i64: 4, 32>}, {pipeline_mode = #tpu.pipeline_mode<synchronous>, transform_indices = @transform_2, window_bounds = array<i64: 4, 1>}, {pipeline_mode = #tpu.pipeline_mode<synchronous>, transform_indices = @transform_3, window_bounds = array<i64: 32, 4>}, {pipeline_mode = #tpu.pipeline_mode<synchronous>, transform_indices = @transform_4, window_bounds = array<i64: 32, 1>}, {transform_indices = @transform_5, window_bounds = array<i64: 2, 32, 256>}]} {
    %cst = arith.constant 1.000000e+00 : f32
    %0 = vector.broadcast %cst : f32 to vector<256x1xf32>
    %c0 = arith.constant 0 : index
    %c0_0 = arith.constant 0 : index
    %c0_1 = arith.constant 0 : index
    %1 = vector.load %arg1[%c0, %c0_0, %c0_1] : memref<2x32x256xf32, #tpu.memory_space<vmem>>, vector<1x32x256xf32>
    %2 = vector.shape_cast %1 : vector<1x32x256xf32> to vector<32x256xf32>
    %cst_2 = arith.constant dense<0.000000e+00> : vector<32x1xf32>
    %3 = tpu.matmul %2, %0, %cst_2 {dimension_numbers = #tpu.dot_dimension_numbers<[1], [0], [0], [1], [0, 0, 1, 1], [], []>} : vector<32x256xf32>, vector<256x1xf32>, vector<32x1xf32> -> vector<32x1xf32>
    %cst_3 = arith.constant 3.906250e-03 : f32
    %4 = vector.broadcast %cst_3 : f32 to vector<32x1xf32>
    %5 = arith.mulf %3, %4 : vector<32x1xf32>
    %c0_4 = arith.constant 0 : index
    %c0_5 = arith.constant 0 : index
    %6 = vector.load %arg2[%c0_4, %c0_5] : memref<4x32xf32, #tpu.memory_space<vmem>>, vector<4x32xf32>
    %cst_6 = arith.constant dense<0.000000e+00> : vector<4x1xf32>
    %7 = tpu.matmul %6, %5, %cst_6 {dimension_numbers = #tpu.dot_dimension_numbers<[1], [0], [0], [1], [0, 0, 1, 1], [], []>} : vector<4x32xf32>, vector<32x1xf32>, vector<4x1xf32> -> vector<4x1xf32>
    %c0_7 = arith.constant 0 : index
    %c0_8 = arith.constant 0 : index
    %8 = vector.load %arg3[%c0_7, %c0_8] : memref<4x1xf32, #tpu.memory_space<vmem>>, vector<4x1xf32>
    %9 = arith.addf %7, %8 : vector<4x1xf32>
    %cst_9 = arith.constant 0.000000e+00 : f32
    %10 = vector.broadcast %cst_9 : f32 to vector<4x1xf32>
    %11 = arith.maximumf %9, %10 : vector<4x1xf32>
    %c0_10 = arith.constant 0 : index
    %c0_11 = arith.constant 0 : index
    %12 = vector.load %arg4[%c0_10, %c0_11] : memref<32x4xf32, #tpu.memory_space<vmem>>, vector<32x4xf32>
    %cst_12 = arith.constant dense<0.000000e+00> : vector<32x1xf32>
    %13 = tpu.matmul %12, %11, %cst_12 {dimension_numbers = #tpu.dot_dimension_numbers<[1], [0], [0], [1], [0, 0, 1, 1], [], []>} : vector<32x4xf32>, vector<4x1xf32>, vector<32x1xf32> -> vector<32x1xf32>
    %c0_13 = arith.constant 0 : index
    %c0_14 = arith.constant 0 : index
    %14 = vector.load %arg5[%c0_13, %c0_14] : memref<32x1xf32, #tpu.memory_space<vmem>>, vector<32x1xf32>
    %15 = arith.addf %13, %14 : vector<32x1xf32>
    %16 = arith.negf %15 : vector<32x1xf32>
    %17 = math.exp %16 : vector<32x1xf32>
    %cst_15 = arith.constant 1.000000e+00 : f32
    %18 = vector.broadcast %cst_15 : f32 to vector<32x1xf32>
    %19 = arith.addf %18, %17 : vector<32x1xf32>
    %20 = arith.divf %18, %19 : vector<32x1xf32>
    %c0_16 = arith.constant 0 : index
    %c0_17 = arith.constant 0 : index
    %c0_18 = arith.constant 0 : index
    %21 = vector.load %arg1[%c0_16, %c0_17, %c0_18] : memref<2x32x256xf32, #tpu.memory_space<vmem>>, vector<1x32x256xf32>
    %22 = vector.shape_cast %21 : vector<1x32x256xf32> to vector<32x256xf32>
    %23 = vector.broadcast %20 : vector<32x1xf32> to vector<32x256xf32>
    %24 = arith.mulf %22, %23 : vector<32x256xf32>
    %c0_19 = arith.constant 0 : index
    %c0_20 = arith.constant 0 : index
    %c0_21 = arith.constant 0 : index
    %25 = vector.load %arg6[%c0_19, %c0_20, %c0_21] : memref<2x32x256xf32, #tpu.memory_space<vmem>>, vector<1x32x256xf32>
    %26 = vector.shape_cast %25 : vector<1x32x256xf32> to vector<32x256xf32>
    %27 = vector.shape_cast %24 : vector<32x256xf32> to vector<1x32x256xf32>
    tpu.vector_store %arg6[%c0_19, %c0_20, %c0_21], %27 {strides = array<i32>} : memref<2x32x256xf32, #tpu.memory_space<vmem>>, vector<1x32x256xf32>,
    %c1 = arith.constant 1 : index
    %c0_22 = arith.constant 0 : index
    %c0_23 = arith.constant 0 : index
    %28 = vector.load %arg1[%c1, %c0_22, %c0_23] : memref<2x32x256xf32, #tpu.memory_space<vmem>>, vector<1x32x256xf32>
    %29 = vector.shape_cast %28 : vector<1x32x256xf32> to vector<32x256xf32>
    %cst_24 = arith.constant dense<0.000000e+00> : vector<32x1xf32>
    %30 = tpu.matmul %29, %0, %cst_24 {dimension_numbers = #tpu.dot_dimension_numbers<[1], [0], [0], [1], [0, 0, 1, 1], [], []>} : vector<32x256xf32>, vector<256x1xf32>, vector<32x1xf32> -> vector<32x1xf32>
    %cst_25 = arith.constant 3.906250e-03 : f32
    %31 = vector.broadcast %cst_25 : f32 to vector<32x1xf32>
    %32 = arith.mulf %30, %31 : vector<32x1xf32>
    %c0_26 = arith.constant 0 : index
    %c0_27 = arith.constant 0 : index
    %33 = vector.load %arg2[%c0_26, %c0_27] : memref<4x32xf32, #tpu.memory_space<vmem>>, vector<4x32xf32>
    %cst_28 = arith.constant dense<0.000000e+00> : vector<4x1xf32>
    %34 = tpu.matmul %33, %32, %cst_28 {dimension_numbers = #tpu.dot_dimension_numbers<[1], [0], [0], [1], [0, 0, 1, 1], [], []>} : vector<4x32xf32>, vector<32x1xf32>, vector<4x1xf32> -> vector<4x1xf32>
    %c0_29 = arith.constant 0 : index
    %c0_30 = arith.constant 0 : index
    %35 = vector.load %arg3[%c0_29, %c0_30] : memref<4x1xf32, #tpu.memory_space<vmem>>, vector<4x1xf32>
    %36 = arith.addf %34, %35 : vector<4x1xf32>
    %cst_31 = arith.constant 0.000000e+00 : f32
    %37 = vector.broadcast %cst_31 : f32 to vector<4x1xf32>
    %38 = arith.maximumf %36, %37 : vector<4x1xf32>
    %c0_32 = arith.constant 0 : index
    %c0_33 = arith.constant 0 : index
    %39 = vector.load %arg4[%c0_32, %c0_33] : memref<32x4xf32, #tpu.memory_space<vmem>>, vector<32x4xf32>
    %cst_34 = arith.constant dense<0.000000e+00> : vector<32x1xf32>
    %40 = tpu.matmul %39, %38, %cst_34 {dimension_numbers = #tpu.dot_dimension_numbers<[1], [0], [0], [1], [0, 0, 1, 1], [], []>} : vector<32x4xf32>, vector<4x1xf32>, vector<32x1xf32> -> vector<32x1xf32>
    %c0_35 = arith.constant 0 : index
    %c0_36 = arith.constant 0 : index
    %41 = vector.load %arg5[%c0_35, %c0_36] : memref<32x1xf32, #tpu.memory_space<vmem>>, vector<32x1xf32>
    %42 = arith.addf %40, %41 : vector<32x1xf32>
    %43 = arith.negf %42 : vector<32x1xf32>
    %44 = math.exp %43 : vector<32x1xf32>
    %cst_37 = arith.constant 1.000000e+00 : f32
    %45 = vector.broadcast %cst_37 : f32 to vector<32x1xf32>
    %46 = arith.addf %45, %44 : vector<32x1xf32>
    %47 = arith.divf %45, %46 : vector<32x1xf32>
    %c1_38 = arith.constant 1 : index
    %c0_39 = arith.constant 0 : index
    %c0_40 = arith.constant 0 : index
    %48 = vector.load %arg1[%c1_38, %c0_39, %c0_40] : memref<2x32x256xf32, #tpu.memory_space<vmem>>, vector<1x32x256xf32>
    %49 = vector.shape_cast %48 : vector<1x32x256xf32> to vector<32x256xf32>
    %50 = vector.broadcast %47 : vector<32x1xf32> to vector<32x256xf32>
    %51 = arith.mulf %49, %50 : vector<32x256xf32>
    %c1_41 = arith.constant 1 : index
    %c0_42 = arith.constant 0 : index
    %c0_43 = arith.constant 0 : index
    %52 = vector.load %arg6[%c1_41, %c0_42, %c0_43] : memref<2x32x256xf32, #tpu.memory_space<vmem>>, vector<1x32x256xf32>
    %53 = vector.shape_cast %52 : vector<1x32x256xf32> to vector<32x256xf32>
    %54 = vector.shape_cast %51 : vector<32x256xf32> to vector<1x32x256xf32>
    tpu.vector_store %arg6[%c1_41, %c0_42, %c0_43], %54 {strides = array<i32>} : memref<2x32x256xf32, #tpu.memory_space<vmem>>, vector<1x32x256xf32>,
    return
  }
  func.func @transform_0(%arg0: i32) -> (i32, i32, i32) {
    %c0_i32 = arith.constant 0 : i32
    %c0_i32_0 = arith.constant 0 : i32
    %c0_i32_1 = arith.constant 0 : i32
    return %arg0, %c0_i32, %c0_i32_0 : i32, i32, i32
  }
  func.func @transform_1(%arg0: i32) -> (i32, i32) {
    %c0_i32 = arith.constant 0 : i32
    %c0_i32_0 = arith.constant 0 : i32
    %c0_i32_1 = arith.constant 0 : i32
    return %c0_i32, %c0_i32_0 : i32, i32
  }
  func.func @transform_2(%arg0: i32) -> (i32, i32) {
    %c0_i32 = arith.constant 0 : i32
    %c0_i32_0 = arith.constant 0 : i32
    %c0_i32_1 = arith.constant 0 : i32
    return %c0_i32, %c0_i32_0 : i32, i32
  }
  func.func @transform_3(%arg0: i32) -> (i32, i32) {
    %c0_i32 = arith.constant 0 : i32
    %c0_i32_0 = arith.constant 0 : i32
    %c0_i32_1 = arith.constant 0 : i32
    return %c0_i32, %c0_i32_0 : i32, i32
  }
  func.func @transform_4(%arg0: i32) -> (i32, i32) {
    %c0_i32 = arith.constant 0 : i32
    %c0_i32_0 = arith.constant 0 : i32
    %c0_i32_1 = arith.constant 0 : i32
    return %c0_i32, %c0_i32_0 : i32, i32
  }
  func.func @transform_5(%arg0: i32) -> (i32, i32, i32) {
    %c0_i32 = arith.constant 0 : i32
    %c0_i32_0 = arith.constant 0 : i32
    %c0_i32_1 = arith.constant 0 : i32
    return %arg0, %c0_i32, %c0_i32_0 : i32, i32, i32
  }
}

</mosaic_0001>

<llo_original>
// kernel: tpu_custom_call.1
$region0: #{tpu_custom_call.1}
  #allocation0 [shape = 'u32[]', space=smem, size = 0x4, offset = 0x4, fixed_abs, tag = 'smem constant byte address 0x4 - core index']
  #allocation1 [shape = 'u32[144,128]{1,0:T(1,128)}', space=vmem, size = 0x12000, scoped, tag = 'internal scratch']
  %s0 = inlined_call_operand.hbm [shape: f32[2,32,256], index: 0, kind: input, shape index: {}]
  %s1 = inlined_call_operand.vmem [shape: f32[4,32], index: 1, kind: input, shape index: {}]
  %s2 = inlined_call_operand.vmem [shape: f32[4,1], index: 2, kind: input, shape index: {}]
  %s3 = inlined_call_operand.vmem [shape: f32[32,4], index: 3, kind: input, shape index: {}]
  %s4 = inlined_call_operand.vmem [shape: f32[32,1], index: 4, kind: input, shape index: {}]
  %s5 = inlined_call_operand.hbm [shape: f32[2,32,256], index: 5, kind: output, shape index: {}]
  %s6 = sld [smem:[#allocation0]]
  $region34: #{tpu_custom_call.1} parent=0
    _
  %s8 = ssub.s32 1, %s6
  %s9 = scalar_select 0, %s8, %s6
  $region1: #{tpu_custom_call.1} parent=0
    #allocation2 [shape = 'u8[65536]{0}', space=vmem, size = 0x10000, scoped, tag = 'input window, operand 0, single buffered']
    #allocation3 [shape = 's32[1]{0}', space=sflag, size = 0x4, scoped, tag = 'scoped memory for tpu_custom_call.1']
    #allocation4 [shape = 's32[1]{0}', space=sflag, size = 0x4, scoped, tag = 'scoped memory for tpu_custom_call.1']
    #allocation5 [shape = 'u8[65536]{0}', space=vmem, size = 0x10000, scoped, tag = 'output window, operand 0, single buffered']
    %10 = vsyncpa [#allocation3], 0
    %11 = vsyncpa [#allocation4], 0
    // Predicated region
    $region2: #{tpu_custom_call.1} parent=1 // pred_check
      _
    $region3: #{tpu_custom_call.1} parent=1 // pred_check_branch
      %13 = sbr.rel (0) target = $region5
    $region4: #{tpu_custom_call.1} parent=1 // pred_region
      %s15 = ssub.s32 2048, 2048
      %16 = vsyncadd [#allocation3], %s15
      %s17 = sshll.u32 [#allocation2], 4
      %s18 = int_to_ptr.vmem [resolvable:$true] %s17
      %23 = dma.hbm_to_vmem [thread:$0]  %s0, 2048, %s18, [#allocation3], 256, 256, 16
    $region5: #{tpu_custom_call.1} parent=1 // pred_fallthru
      _
    // Predicated region
    $region6: #{tpu_custom_call.1} parent=1 // pred_check
      _
    $region7: #{tpu_custom_call.1} parent=1 // pred_check_branch
      %25 = sbr.rel (0) target = $region9
    $region8: #{tpu_custom_call.1} parent=1 // pred_region
      _
    $region9: #{tpu_custom_call.1} parent=1 // pred_fallthru
      _
    // Predicated region
    $region10: #{tpu_custom_call.1} parent=1 // pred_check
      _
    $region11: #{tpu_custom_call.1} parent=1 // pred_check_branch
      %27 = sbr.rel (0) target = $region13
    $region12: #{tpu_custom_call.1} parent=1 // pred_region
      _
    $region13: #{tpu_custom_call.1} parent=1 // pred_fallthru
      _
    // Predicated region
    $region14: #{tpu_custom_call.1} parent=1 // pred_check
      _
    $region15: #{tpu_custom_call.1} parent=1 // pred_check_branch
      %29 = sbr.rel (0) target = $region17
    $region16: #{tpu_custom_call.1} parent=1 // pred_region
      _
    $region17: #{tpu_custom_call.1} parent=1 // pred_fallthru
      _
    // Predicated region
    $region18: #{tpu_custom_call.1} parent=1 // pred_check
      _
    $region19: #{tpu_custom_call.1} parent=1 // pred_check_branch
      %31 = sbr.rel (0) target = $region21
    $region20: #{tpu_custom_call.1} parent=1 // pred_region
      _
    $region21: #{tpu_custom_call.1} parent=1 // pred_fallthru
      _
    // Predicated region
    $region22: #{tpu_custom_call.1} parent=1 // pred_check
      _
    $region23: #{tpu_custom_call.1} parent=1 // pred_check_branch
      %33 = sbr.rel (0) target = $region25
    $region24: #{tpu_custom_call.1} parent=1 // pred_region
      %34 = dma.done [#allocation3], 2048
    $region25: #{tpu_custom_call.1} parent=1 // pred_fallthru
      _
    %v35 = vld [vmem:[#allocation2] sm:$0xff]
    %v36 = vld [vmem:[#allocation2 + $0x8] sm:$0xff]
    %v37 = vld [vmem:[#allocation2 + $0x10] sm:$0xff]
    %v38 = vld [vmem:[#allocation2 + $0x18] sm:$0xff]
    %v39 = vld [vmem:[#allocation2 + $0x20] sm:$0xff]
    %v40 = vld [vmem:[#allocation2 + $0x28] sm:$0xff]
    %v41 = vld [vmem:[#allocation2 + $0x30] sm:$0xff]
    %v42 = vld [vmem:[#allocation2 + $0x38] sm:$0xff]
    %43 = vmatprep.subr.mxu0 0.0
    %44 = vmatpush1.msra.mxu0 1.0
    %45 = vmatprep.subr.mxu0 0.0
    %46 = vmatpush1.msra.mxu0 1.0
    %47 = vmatprep.subr.mxu0 0.0
    %48 = vmatpush1.msra.mxu0 1.0
    %49 = vmatprep.subr.mxu0 0.0
    %50 = vmatpush1.msra.mxu0 1.0
    %51 = vmatprep.subr.mxu0 0.0
    %52 = vmatpush1.msra.mxu0 1.0
    %53 = vmatprep.subr.mxu0 0.0
    %54 = vmatpush1.msra.mxu0 1.0
    %55 = vmatprep.subr.mxu0 0.0
    %56 = vmatpush1.msra.mxu0 1.0
    %57 = vmatprep.subr.mxu0 0.0
    %58 = vmatpush1.msra.mxu0 1.0
    %59 = vmatprep.subr.mxu0 0.0
    %60 = vmatpush1.msra.mxu0 1.0
    %61 = vmatprep.subr.mxu0 0.0
    %62 = vmatpush1.msra.mxu0 1.0
    %63 = vmatprep.subr.mxu0 0.0
    %64 = vmatpush1.msra.mxu0 1.0
    %65 = vmatprep.subr.mxu0 0.0
    %66 = vmatpush1.msra.mxu0 1.0
    %67 = vmatprep.subr.mxu0 0.0
    %68 = vmatpush1.msra.mxu0 1.0
    %69 = vmatprep.subr.mxu0 0.0
    %70 = vmatpush1.msra.mxu0 1.0
    %71 = vmatprep.subr.mxu0 0.0
    %72 = vmatpush1.msra.mxu0 1.0
    %73 = vmatprep.subr.mxu0 0.0
    %74 = vmatpush1.msra.mxu0 1.0
    %75 = vmatprep.subr.mxu0 0.0
    %76 = vmatpush1.msra.mxu0 1.0
    %77 = vmatprep.subr.mxu0 0.0
    %78 = vmatpush1.msra.mxu0 1.0
    %79 = vmatprep.subr.mxu0 0.0
    %80 = vmatpush1.msra.mxu0 1.0
    %81 = vmatprep.subr.mxu0 0.0
    %82 = vmatpush1.msra.mxu0 1.0
    %83 = vmatprep.subr.mxu0 0.0
    %84 = vmatpush1.msra.mxu0 1.0
    %85 = vmatprep.subr.mxu0 0.0
    %86 = vmatpush1.msra.mxu0 1.0
    %87 = vmatprep.subr.mxu0 0.0
    %88 = vmatpush1.msra.mxu0 1.0
    %89 = vmatprep.subr.mxu0 0.0
    %90 = vmatpush1.msra.mxu0 1.0
    %91 = vmatprep.subr.mxu0 0.0
    %92 = vmatpush1.msra.mxu0 1.0
    %93 = vmatprep.subr.mxu0 0.0
    %94 = vmatpush1.msra.mxu0 1.0
    %95 = vmatprep.subr.mxu0 0.0
    %96 = vmatpush1.msra.mxu0 1.0
    %97 = vmatprep.subr.mxu0 0.0
    %98 = vmatpush1.msra.mxu0 1.0
    %99 = vmatprep.subr.mxu0 0.0
    %100 = vmatpush1.msra.mxu0 1.0
    %101 = vmatprep.subr.mxu0 0.0
    %102 = vmatpush1.msra.mxu0 1.0
    %103 = vmatprep.subr.mxu0 0.0
    %104 = vmatpush1.msra.mxu0 1.0
    %105 = vmatprep.subr.mxu0 0.0
    %106 = vmatpush1.msra.mxu0 1.0
    %107 = vmatprep.mubr.f32.mxu0 %v36
    %108 = vmatmul.mubr.f32.gmra.mrb[0].mxu0 %v35
    %v109 = vpop.f32.mrb[0].mxu0
    %v110 = vadd.f32 0.0, %v109
    %v111 = vpop.f32.mrb[0].mxu0
    %112 = vmatprep.mubr.f32.mxu0 %v38
    %113 = vmatmul.mubr.f32.gmra.mrb[0].mxu0 %v37
    %v114 = vpop.f32.mrb[0].mxu0
    %v115 = vadd.f32 0.0, %v114
    %v116 = vpop.f32.mrb[0].mxu0
    %117 = vmatprep.mubr.f32.mxu0 %v40
    %118 = vmatmul.mubr.f32.gmra.mrb[0].mxu0 %v39
    %v119 = vpop.f32.mrb[0].mxu0
    %v120 = vadd.f32 0.0, %v119
    %v121 = vpop.f32.mrb[0].mxu0
    %122 = vmatprep.mubr.f32.mxu0 %v42
    %123 = vmatmul.mubr.f32.gmra.mrb[0].mxu0 %v41
    %v124 = vpop.f32.mrb[0].mxu0
    %v125 = vadd.f32 0.0, %v124
    %v126 = vpop.f32.mrb[0].mxu0
    %127 = vdwg.mxu0
    %v128 = vmul.f32 %v110, 0.00390625
    %v129 = vmul.f32 %v115, 0.00390625
    %v130 = vmul.f32 %v120, 0.00390625
    %v131 = vmul.f32 %v125, 0.00390625
    %v132 = vld [vmem:[%s1] sm:$0xf]
    %v133 = vld [vmem:[%s2] sm:$0xf]
    %vm134 = vcmask 261120
    %v136 = vsel %vm134, %v132, 0
    %138 = vmatprep.subr.mxu0 0.0
    %139 = vmatpush1.msra.mxu0 %v128
    %140 = vmatprep.subr.mxu0 0.0
    %141 = vmatpush1.msra.mxu0 %v129
    %142 = vmatprep.subr.mxu0 0.0
    %143 = vmatpush1.msra.mxu0 %v130
    %144 = vmatprep.subr.mxu0 0.0
    %145 = vmatpush1.msra.mxu0 %v131
    %146 = vmatprep.subr.mxu0 0.0
    %147 = vmatpush1.msra.mxu0 0.0
    %148 = vmatprep.subr.mxu0 0.0
    %149 = vmatpush1.msra.mxu0 0.0
    %150 = vmatprep.subr.mxu0 0.0
    %151 = vmatpush1.msra.mxu0 0.0
    %152 = vmatprep.subr.mxu0 0.0
    %153 = vmatpush1.msra.mxu0 0.0
    %154 = vmatprep.subr.mxu0 0.0
    %155 = vmatpush1.msra.mxu0 0.0
    %156 = vmatprep.subr.mxu0 0.0
    %157 = vmatpush1.msra.mxu0 0.0
    %158 = vmatprep.subr.mxu0 0.0
    %159 = vmatpush1.msra.mxu0 0.0
    %160 = vmatprep.subr.mxu0 0.0
    %161 = vmatpush1.msra.mxu0 0.0
    %162 = vmatprep.subr.mxu0 0.0
    %163 = vmatpush1.msra.mxu0 0.0
    %164 = vmatprep.subr.mxu0 0.0
    %165 = vmatpush1.msra.mxu0 0.0
    %166 = vmatprep.subr.mxu0 0.0
    %167 = vmatpush1.msra.mxu0 0.0
    %168 = vmatprep.subr.mxu0 0.0
    %169 = vmatpush1.msra.mxu0 0.0
    %170 = vmatprep.subr.mxu0 0.0
    %171 = vmatpush1.msra.mxu0 0.0
    %172 = vmatprep.subr.mxu0 0.0
    %173 = vmatpush1.msra.mxu0 0.0
    %174 = vmatprep.subr.mxu0 0.0
    %175 = vmatpush1.msra.mxu0 0.0
    %176 = vmatprep.subr.mxu0 0.0
    %177 = vmatpush1.msra.mxu0 0.0
    %178 = vmatprep.subr.mxu0 0.0
    %179 = vmatpush1.msra.mxu0 0.0
    %180 = vmatprep.subr.mxu0 0.0
    %181 = vmatpush1.msra.mxu0 0.0
    %182 = vmatprep.subr.mxu0 0.0
    %183 = vmatpush1.msra.mxu0 0.0
    %184 = vmatprep.subr.mxu0 0.0
    %185 = vmatpush1.msra.mxu0 0.0
    %186 = vmatprep.subr.mxu0 0.0
    %187 = vmatpush1.msra.mxu0 0.0
    %188 = vmatprep.subr.mxu0 0.0
    %189 = vmatpush1.msra.mxu0 0.0
    %190 = vmatprep.subr.mxu0 0.0
    %191 = vmatpush1.msra.mxu0 0.0
    %192 = vmatprep.subr.mxu0 0.0
    %193 = vmatpush1.msra.mxu0 0.0
    %194 = vmatprep.subr.mxu0 0.0
    %195 = vmatpush1.msra.mxu0 0.0
    %196 = vmatprep.subr.mxu0 0.0
    %197 = vmatpush1.msra.mxu0 0.0
    %198 = vmatprep.subr.mxu0 0.0
    %199 = vmatpush1.msra.mxu0 0.0
    %200 = vmatprep.subr.mxu0 0.0
    %201 = vmatpush1.msra.mxu0 0.0
    %202 = vmatprep.mubr.f32.mxu0 0.0
    %203 = vmatmul.mubr.f32.gmra.mrb[0].mxu0 %v136
    %v204 = vpop.f32.mrb[0].mxu0
    %v205 = vadd.f32 %v133, %v204
    %v206 = vpop.f32.mrb[0].mxu0
    %207 = vdwg.mxu0
    %v208 = vmax.f32 %v205, 0.0
    %v209 = vld [vmem:[%s3] sm:$0xff]
    %v210 = vld [vmem:[%s3 + $0x8] sm:$0xff]
    %v211 = vld [vmem:[%s3 + $0x10] sm:$0xff]
    %v212 = vld [vmem:[%s3 + $0x18] sm:$0xff]
    %v213 = vld [vmem:[%s4] sm:$0xff]
    %v214 = vld [vmem:[%s4 + $0x8] sm:$0xff]
    %v215 = vld [vmem:[%s4 + $0x10] sm:$0xff]
    %v216 = vld [vmem:[%s4 + $0x18] sm:$0xff]
    %vm217 = vcmask 31744
    %v219 = vsel %vm217, %v209, 0
    %v222 = vsel %vm217, %v210, 0
    %v225 = vsel %vm217, %v211, 0
    %v228 = vsel %vm217, %v212, 0
    %vm230 = vcmask 1043456
    %v232 = vsel %vm230, %v208, 0
    %234 = vmatprep.subr.mxu0 0.0
    %235 = vmatpush1.msra.mxu0 %v232
    %236 = vmatprep.subr.mxu0 0.0
    %237 = vmatpush1.msra.mxu0 0.0
    %238 = vmatprep.subr.mxu0 0.0
    %239 = vmatpush1.msra.mxu0 0.0
    %240 = vmatprep.subr.mxu0 0.0
    %241 = vmatpush1.msra.mxu0 0.0
    %242 = vmatprep.subr.mxu0 0.0
    %243 = vmatpush1.msra.mxu0 0.0
    %244 = vmatprep.subr.mxu0 0.0
    %245 = vmatpush1.msra.mxu0 0.0
    %246 = vmatprep.subr.mxu0 0.0
    %247 = vmatpush1.msra.mxu0 0.0
    %248 = vmatprep.subr.mxu0 0.0
    %249 = vmatpush1.msra.mxu0 0.0
    %250 = vmatprep.subr.mxu0 0.0
    %251 = vmatpush1.msra.mxu0 0.0
    %252 = vmatprep.subr.mxu0 0.0
    %253 = vmatpush1.msra.mxu0 0.0
    %254 = vmatprep.subr.mxu0 0.0
    %255 = vmatpush1.msra.mxu0 0.0
    %256 = vmatprep.subr.mxu0 0.0
    %257 = vmatpush1.msra.mxu0 0.0
    %258 = vmatprep.subr.mxu0 0.0
    %259 = vmatpush1.msra.mxu0 0.0
    %260 = vmatprep.subr.mxu0 0.0
    %261 = vmatpush1.msra.mxu0 0.0
    %262 = vmatprep.subr.mxu0 0.0
    %263 = vmatpush1.msra.mxu0 0.0
    %264 = vmatprep.subr.mxu0 0.0
    %265 = vmatpush1.msra.mxu0 0.0
    %266 = vmatprep.subr.mxu0 0.0
    %267 = vmatpush1.msra.mxu0 0.0
    %268 = vmatprep.subr.mxu0 0.0
    %269 = vmatpush1.msra.mxu0 0.0
    %270 = vmatprep.subr.mxu0 0.0
    %271 = vmatpush1.msra.mxu0 0.0
    %272 = vmatprep.subr.mxu0 0.0
    %273 = vmatpush1.msra.mxu0 0.0
    %274 = vmatprep.subr.mxu0 0.0
    %275 = vmatpush1.msra.mxu0 0.0
    %276 = vmatprep.subr.mxu0 0.0
    %277 = vmatpush1.msra.mxu0 0.0
    %278 = vmatprep.subr.mxu0 0.0
    %279 = vmatpush1.msra.mxu0 0.0
    %280 = vmatprep.subr.mxu0 0.0
    %281 = vmatpush1.msra.mxu0 0.0
    %282 = vmatprep.subr.mxu0 0.0
    %283 = vmatpush1.msra.mxu0 0.0
    %284 = vmatprep.subr.mxu0 0.0
    %285 = vmatpush1.msra.mxu0 0.0
    %286 = vmatprep.subr.mxu0 0.0
    %287 = vmatpush1.msra.mxu0 0.0
    %288 = vmatprep.subr.mxu0 0.0
    %289 = vmatpush1.msra.mxu0 0.0
    %290 = vmatprep.subr.mxu0 0.0
    %291 = vmatpush1.msra.mxu0 0.0
    %292 = vmatprep.subr.mxu0 0.0
    %293 = vmatpush1.msra.mxu0 0.0
    %294 = vmatprep.subr.mxu0 0.0
    %295 = vmatpush1.msra.mxu0 0.0
    %296 = vmatprep.subr.mxu0 0.0
    %297 = vmatpush1.msra.mxu0 0.0
    %298 = vmatprep.mubr.f32.mxu0 0.0
    %299 = vmatmul.mubr.f32.gmra.mrb[0].mxu0 %v219
    %v300 = vpop.f32.mrb[0].mxu0
    %v301 = vadd.f32 %v213, %v300
    %v302 = vpop.f32.mrb[0].mxu0
    %303 = vmatprep.mubr.f32.mxu0 0.0
    %304 = vmatmul.mubr.f32.gmra.mrb[0].mxu0 %v222
    %v305 = vpop.f32.mrb[0].mxu0
    %v306 = vadd.f32 %v214, %v305
    %v307 = vpop.f32.mrb[0].mxu0
    %308 = vmatprep.mubr.f32.mxu0 0.0
    %309 = vmatmul.mubr.f32.gmra.mrb[0].mxu0 %v225
    %v310 = vpop.f32.mrb[0].mxu0
    %v311 = vadd.f32 %v215, %v310
    %v312 = vpop.f32.mrb[0].mxu0
    %313 = vmatprep.mubr.f32.mxu0 0.0
    %314 = vmatmul.mubr.f32.gmra.mrb[0].mxu0 %v228
    %v315 = vpop.f32.mrb[0].mxu0
    %v316 = vadd.f32 %v216, %v315
    %v317 = vpop.f32.mrb[0].mxu0
    %318 = vdwg.mxu0
    %v319 = vxor.u32 %v301, 2147483648
    %v320 = vxor.u32 %v306, 2147483648
    %v321 = vxor.u32 %v311, 2147483648
    %v322 = vxor.u32 %v316, 2147483648
    %v323 = vmul.f32 %v319, 1.442695
    %v324 = vpow.pop %v323
    %v325 = vmul.f32 %v320, 1.442695
    %v326 = vpow.pop %v325
    %v327 = vmul.f32 %v321, 1.442695
    %v328 = vpow.pop %v327
    %v329 = vmul.f32 %v322, 1.442695
    %v330 = vpow.pop %v329
    %v331 = vadd.f32 %v324, 1.0
    %v332 = vadd.f32 %v326, 1.0
    %v333 = vadd.f32 %v328, 1.0
    %v334 = vadd.f32 %v330, 1.0
    %v335 = vrcp.pop %v331
    %v336 = vmul.f32 1.0, %v335
    %v337 = vrcp.pop %v332
    %v338 = vmul.f32 1.0, %v337
    %v339 = vrcp.pop %v333
    %v340 = vmul.f32 1.0, %v339
    %v341 = vrcp.pop %v334
    %v342 = vmul.f32 1.0, %v341
    %344 = vset.pattern.permute.xlu0 0
    %345 = vperm.xlu0 %344, %v336
    %v346 = vpop.permute.xlu0 %345
    %349 = vset.pattern.permute.xlu0 0
    %350 = vperm.xlu0 %349, %v338
    %v351 = vpop.permute.xlu0 %350
    %354 = vset.pattern.permute.xlu0 0
    %355 = vperm.xlu0 %354, %v340
    %v356 = vpop.permute.xlu0 %355
    %359 = vset.pattern.permute.xlu0 0
    %360 = vperm.xlu0 %359, %v342
    %v361 = vpop.permute.xlu0 %360
    %v363 = vmul.f32 %v35, %v346
    %v364 = vmul.f32 %v36, %v346
    %v365 = vmul.f32 %v37, %v351
    %v366 = vmul.f32 %v38, %v351
    %v367 = vmul.f32 %v39, %v356
    %v368 = vmul.f32 %v40, %v356
    %v369 = vmul.f32 %v41, %v361
    %v370 = vmul.f32 %v42, %v361
    %371 = vst [vmem:[#allocation5] sm:$0xff] %v363
    %372 = vst [vmem:[#allocation5 + $0x8] sm:$0xff] %v364
    %373 = vst [vmem:[#allocation5 + $0x10] sm:$0xff] %v365
    %374 = vst [vmem:[#allocation5 + $0x18] sm:$0xff] %v366
    %375 = vst [vmem:[#allocation5 + $0x20] sm:$0xff] %v367
    %376 = vst [vmem:[#allocation5 + $0x28] sm:$0xff] %v368
    %377 = vst [vmem:[#allocation5 + $0x30] sm:$0xff] %v369
    %378 = vst [vmem:[#allocation5 + $0x38] sm:$0xff] %v370
    %s379 = scalar_lea.vmem [#allocation2], 64
    %v380 = vld [vmem:[%s379] sm:$0xff]
    %v381 = vld [vmem:[%s379 + $0x8] sm:$0xff]
    %v382 = vld [vmem:[%s379 + $0x10] sm:$0xff]
    %v383 = vld [vmem:[%s379 + $0x18] sm:$0xff]
    %v384 = vld [vmem:[%s379 + $0x20] sm:$0xff]
    %v385 = vld [vmem:[%s379 + $0x28] sm:$0xff]
    %v386 = vld [vmem:[%s379 + $0x30] sm:$0xff]
    %v387 = vld [vmem:[%s379 + $0x38] sm:$0xff]
    %388 = vmatprep.subr.mxu0 0.0
    %389 = vmatpush1.msra.mxu0 1.0
    %390 = vmatprep.subr.mxu0 0.0
    %391 = vmatpush1.msra.mxu0 1.0
    %392 = vmatprep.subr.mxu0 0.0
    %393 = vmatpush1.msra.mxu0 1.0
    %394 = vmatprep.subr.mxu0 0.0
    %395 = vmatpush1.msra.mxu0 1.0
    %396 = vmatprep.subr.mxu0 0.0
    %397 = vmatpush1.msra.mxu0 1.0
    %398 = vmatprep.subr.mxu0 0.0
    %399 = vmatpush1.msra.mxu0 1.0
    %400 = vmatprep.subr.mxu0 0.0
    %401 = vmatpush1.msra.mxu0 1.0
    %402 = vmatprep.subr.mxu0 0.0
    %403 = vmatpush1.msra.mxu0 1.0
    %404 = vmatprep.subr.mxu0 0.0
    %405 = vmatpush1.msra.mxu0 1.0
    %406 = vmatprep.subr.mxu0 0.0
    %407 = vmatpush1.msra.mxu0 1.0
    %408 = vmatprep.subr.mxu0 0.0
    %409 = vmatpush1.msra.mxu0 1.0
    %410 = vmatprep.subr.mxu0 0.0
    %411 = vmatpush1.msra.mxu0 1.0
    %412 = vmatprep.subr.mxu0 0.0
    %413 = vmatpush1.msra.mxu0 1.0
    %414 = vmatprep.subr.mxu0 0.0
    %415 = vmatpush1.msra.mxu0 1.0
    %416 = vmatprep.subr.mxu0 0.0
    %417 = vmatpush1.msra.mxu0 1.0
    %418 = vmatprep.subr.mxu0 0.0
    %419 = vmatpush1.msra.mxu0 1.0
    %420 = vmatprep.subr.mxu0 0.0
    %421 = vmatpush1.msra.mxu0 1.0
    %422 = vmatprep.subr.mxu0 0.0
    %423 = vmatpush1.msra.mxu0 1.0
    %424 = vmatprep.subr.mxu0 0.0
    %425 = vmatpush1.msra.mxu0 1.0
    %426 = vmatprep.subr.mxu0 0.0
    %427 = vmatpush1.msra.mxu0 1.0
    %428 = vmatprep.subr.mxu0 0.0
    %429 = vmatpush1.msra.mxu0 1.0
    %430 = vmatprep.subr.mxu0 0.0
    %431 = vmatpush1.msra.mxu0 1.0
    %432 = vmatprep.subr.mxu0 0.0
    %433 = vmatpush1.msra.mxu0 1.0
    %434 = vmatprep.subr.mxu0 0.0
    %435 = vmatpush1.msra.mxu0 1.0
    %436 = vmatprep.subr.mxu0 0.0
    %437 = vmatpush1.msra.mxu0 1.0
    %438 = vmatprep.subr.mxu0 0.0
    %439 = vmatpush1.msra.mxu0 1.0
    %440 = vmatprep.subr.mxu0 0.0
    %441 = vmatpush1.msra.mxu0 1.0
    %442 = vmatprep.subr.mxu0 0.0
    %443 = vmatpush1.msra.mxu0 1.0
    %444 = vmatprep.subr.mxu0 0.0
    %445 = vmatpush1.msra.mxu0 1.0
    %446 = vmatprep.subr.mxu0 0.0
    %447 = vmatpush1.msra.mxu0 1.0
    %448 = vmatprep.subr.mxu0 0.0
    %449 = vmatpush1.msra.mxu0 1.0
    %450 = vmatprep.subr.mxu0 0.0
    %451 = vmatpush1.msra.mxu0 1.0
    %452 = vmatprep.mubr.f32.mxu0 %v381
    %453 = vmatmul.mubr.f32.gmra.mrb[0].mxu0 %v380
    %v454 = vpop.f32.mrb[0].mxu0
    %v455 = vadd.f32 0.0, %v454
    %v456 = vpop.f32.mrb[0].mxu0
    %457 = vmatprep.mubr.f32.mxu0 %v383
    %458 = vmatmul.mubr.f32.gmra.mrb[0].mxu0 %v382
    %v459 = vpop.f32.mrb[0].mxu0
    %v460 = vadd.f32 0.0, %v459
    %v461 = vpop.f32.mrb[0].mxu0
    %462 = vmatprep.mubr.f32.mxu0 %v385
    %463 = vmatmul.mubr.f32.gmra.mrb[0].mxu0 %v384
    %v464 = vpop.f32.mrb[0].mxu0
    %v465 = vadd.f32 0.0, %v464
    %v466 = vpop.f32.mrb[0].mxu0
    %467 = vmatprep.mubr.f32.mxu0 %v387
    %468 = vmatmul.mubr.f32.gmra.mrb[0].mxu0 %v386
    %v469 = vpop.f32.mrb[0].mxu0
    %v470 = vadd.f32 0.0, %v469
    %v471 = vpop.f32.mrb[0].mxu0
    %472 = vdwg.mxu0
    %v473 = vmul.f32 %v455, 0.00390625
    %v474 = vmul.f32 %v460, 0.00390625
    %v475 = vmul.f32 %v465, 0.00390625
    %v476 = vmul.f32 %v470, 0.00390625
    %v477 = vld [vmem:[%s1] sm:$0xf]
    %v478 = vld [vmem:[%s2] sm:$0xf]
    %v480 = vsel %vm134, %v477, 0
    %482 = vmatprep.subr.mxu0 0.0
    %483 = vmatpush1.msra.mxu0 %v473
    %484 = vmatprep.subr.mxu0 0.0
    %485 = vmatpush1.msra.mxu0 %v474
    %486 = vmatprep.subr.mxu0 0.0
    %487 = vmatpush1.msra.mxu0 %v475
    %488 = vmatprep.subr.mxu0 0.0
    %489 = vmatpush1.msra.mxu0 %v476
    %490 = vmatprep.subr.mxu0 0.0
    %491 = vmatpush1.msra.mxu0 0.0
    %492 = vmatprep.subr.mxu0 0.0
    %493 = vmatpush1.msra.mxu0 0.0
    %494 = vmatprep.subr.mxu0 0.0
    %495 = vmatpush1.msra.mxu0 0.0
    %496 = vmatprep.subr.mxu0 0.0
    %497 = vmatpush1.msra.mxu0 0.0
    %498 = vmatprep.subr.mxu0 0.0
    %499 = vmatpush1.msra.mxu0 0.0
    %500 = vmatprep.subr.mxu0 0.0
    %501 = vmatpush1.msra.mxu0 0.0
    %502 = vmatprep.subr.mxu0 0.0
    %503 = vmatpush1.msra.mxu0 0.0
    %504 = vmatprep.subr.mxu0 0.0
    %505 = vmatpush1.msra.mxu0 0.0
    %506 = vmatprep.subr.mxu0 0.0
    %507 = vmatpush1.msra.mxu0 0.0
    %508 = vmatprep.subr.mxu0 0.0
    %509 = vmatpush1.msra.mxu0 0.0
    %510 = vmatprep.subr.mxu0 0.0
    %511 = vmatpush1.msra.mxu0 0.0
    %512 = vmatprep.subr.mxu0 0.0
    %513 = vmatpush1.msra.mxu0 0.0
    %514 = vmatprep.subr.mxu0 0.0
    %515 = vmatpush1.msra.mxu0 0.0
    %516 = vmatprep.subr.mxu0 0.0
    %517 = vmatpush1.msra.mxu0 0.0
    %518 = vmatprep.subr.mxu0 0.0
    %519 = vmatpush1.msra.mxu0 0.0
    %520 = vmatprep.subr.mxu0 0.0
    %521 = vmatpush1.msra.mxu0 0.0
    %522 = vmatprep.subr.mxu0 0.0
    %523 = vmatpush1.msra.mxu0 0.0
    %524 = vmatprep.subr.mxu0 0.0
    %525 = vmatpush1.msra.mxu0 0.0
    %526 = vmatprep.subr.mxu0 0.0
    %527 = vmatpush1.msra.mxu0 0.0
    %528 = vmatprep.subr.mxu0 0.0
    %529 = vmatpush1.msra.mxu0 0.0
    %530 = vmatprep.subr.mxu0 0.0
    %531 = vmatpush1.msra.mxu0 0.0
    %532 = vmatprep.subr.mxu0 0.0
    %533 = vmatpush1.msra.mxu0 0.0
    %534 = vmatprep.subr.mxu0 0.0
    %535 = vmatpush1.msra.mxu0 0.0
    %536 = vmatprep.subr.mxu0 0.0
    %537 = vmatpush1.msra.mxu0 0.0
    %538 = vmatprep.subr.mxu0 0.0
    %539 = vmatpush1.msra.mxu0 0.0
    %540 = vmatprep.subr.mxu0 0.0
    %541 = vmatpush1.msra.mxu0 0.0
    %542 = vmatprep.subr.mxu0 0.0
    %543 = vmatpush1.msra.mxu0 0.0
    %544 = vmatprep.subr.mxu0 0.0
    %545 = vmatpush1.msra.mxu0 0.0
    %546 = vmatprep.mubr.f32.mxu0 0.0
    %547 = vmatmul.mubr.f32.gmra.mrb[0].mxu0 %v480
    %v548 = vpop.f32.mrb[0].mxu0
    %v549 = vadd.f32 %v478, %v548
    %v550 = vpop.f32.mrb[0].mxu0
    %551 = vdwg.mxu0
    %v552 = vmax.f32 %v549, 0.0
    %v553 = vld [vmem:[%s3] sm:$0xff]
    %v554 = vld [vmem:[%s3 + $0x8] sm:$0xff]
    %v555 = vld [vmem:[%s3 + $0x10] sm:$0xff]
    %v556 = vld [vmem:[%s3 + $0x18] sm:$0xff]
    %v557 = vld [vmem:[%s4] sm:$0xff]
    %v558 = vld [vmem:[%s4 + $0x8] sm:$0xff]
    %v559 = vld [vmem:[%s4 + $0x10] sm:$0xff]
    %v560 = vld [vmem:[%s4 + $0x18] sm:$0xff]
    %v562 = vsel %vm217, %v553, 0
    %v565 = vsel %vm217, %v554, 0
    %v568 = vsel %vm217, %v555, 0
    %v571 = vsel %vm217, %v556, 0
    %v574 = vsel %vm230, %v552, 0
    %576 = vmatprep.subr.mxu0 0.0
    %577 = vmatpush1.msra.mxu0 %v574
    %578 = vmatprep.subr.mxu0 0.0
    %579 = vmatpush1.msra.mxu0 0.0
    %580 = vmatprep.subr.mxu0 0.0
    %581 = vmatpush1.msra.mxu0 0.0
    %582 = vmatprep.subr.mxu0 0.0
    %583 = vmatpush1.msra.mxu0 0.0
    %584 = vmatprep.subr.mxu0 0.0
    %585 = vmatpush1.msra.mxu0 0.0
    %586 = vmatprep.subr.mxu0 0.0
    %587 = vmatpush1.msra.mxu0 0.0
    %588 = vmatprep.subr.mxu0 0.0
    %589 = vmatpush1.msra.mxu0 0.0
    %590 = vmatprep.subr.mxu0 0.0
    %591 = vmatpush1.msra.mxu0 0.0
    %592 = vmatprep.subr.mxu0 0.0
    %593 = vmatpush1.msra.mxu0 0.0
    %594 = vmatprep.subr.mxu0 0.0
    %595 = vmatpush1.msra.mxu0 0.0
    %596 = vmatprep.subr.mxu0 0.0
    %597 = vmatpush1.msra.mxu0 0.0
    %598 = vmatprep.subr.mxu0 0.0
    %599 = vmatpush1.msra.mxu0 0.0
    %600 = vmatprep.subr.mxu0 0.0
    %601 = vmatpush1.msra.mxu0 0.0
    %602 = vmatprep.subr.mxu0 0.0
    %603 = vmatpush1.msra.mxu0 0.0
    %604 = vmatprep.subr.mxu0 0.0
    %605 = vmatpush1.msra.mxu0 0.0
    %606 = vmatprep.subr.mxu0 0.0
    %607 = vmatpush1.msra.mxu0 0.0
    %608 = vmatprep.subr.mxu0 0.0
    %609 = vmatpush1.msra.mxu0 0.0
    %610 = vmatprep.subr.mxu0 0.0
    %611 = vmatpush1.msra.mxu0 0.0
    %612 = vmatprep.subr.mxu0 0.0
    %613 = vmatpush1.msra.mxu0 0.0
    %614 = vmatprep.subr.mxu0 0.0
    %615 = vmatpush1.msra.mxu0 0.0
    %616 = vmatprep.subr.mxu0 0.0
    %617 = vmatpush1.msra.mxu0 0.0
    %618 = vmatprep.subr.mxu0 0.0
    %619 = vmatpush1.msra.mxu0 0.0
    %620 = vmatprep.subr.mxu0 0.0
    %621 = vmatpush1.msra.mxu0 0.0
    %622 = vmatprep.subr.mxu0 0.0
    %623 = vmatpush1.msra.mxu0 0.0
    %624 = vmatprep.subr.mxu0 0.0
    %625 = vmatpush1.msra.mxu0 0.0
    %626 = vmatprep.subr.mxu0 0.0
    %627 = vmatpush1.msra.mxu0 0.0
    %628 = vmatprep.subr.mxu0 0.0
    %629 = vmatpush1.msra.mxu0 0.0
    %630 = vmatprep.subr.mxu0 0.0
    %631 = vmatpush1.msra.mxu0 0.0
    %632 = vmatprep.subr.mxu0 0.0
    %633 = vmatpush1.msra.mxu0 0.0
    %634 = vmatprep.subr.mxu0 0.0
    %635 = vmatpush1.msra.mxu0 0.0
    %636 = vmatprep.subr.mxu0 0.0
    %637 = vmatpush1.msra.mxu0 0.0
    %638 = vmatprep.subr.mxu0 0.0
    %639 = vmatpush1.msra.mxu0 0.0
    %640 = vmatprep.mubr.f32.mxu0 0.0
    %641 = vmatmul.mubr.f32.gmra.mrb[0].mxu0 %v562
    %v642 = vpop.f32.mrb[0].mxu0
    %v643 = vadd.f32 %v557, %v642
    %v644 = vpop.f32.mrb[0].mxu0
    %645 = vmatprep.mubr.f32.mxu0 0.0
    %646 = vmatmul.mubr.f32.gmra.mrb[0].mxu0 %v565
    %v647 = vpop.f32.mrb[0].mxu0
    %v648 = vadd.f32 %v558, %v647
    %v649 = vpop.f32.mrb[0].mxu0
    %650 = vmatprep.mubr.f32.mxu0 0.0
    %651 = vmatmul.mubr.f32.gmra.mrb[0].mxu0 %v568
    %v652 = vpop.f32.mrb[0].mxu0
    %v653 = vadd.f32 %v559, %v652
    %v654 = vpop.f32.mrb[0].mxu0
    %655 = vmatprep.mubr.f32.mxu0 0.0
    %656 = vmatmul.mubr.f32.gmra.mrb[0].mxu0 %v571
    %v657 = vpop.f32.mrb[0].mxu0
    %v658 = vadd.f32 %v560, %v657
    %v659 = vpop.f32.mrb[0].mxu0
    %660 = vdwg.mxu0
    %v661 = vxor.u32 %v643, 2147483648
    %v662 = vxor.u32 %v648, 2147483648
    %v663 = vxor.u32 %v653, 2147483648
    %v664 = vxor.u32 %v658, 2147483648
    %v665 = vmul.f32 %v661, 1.442695
    %v666 = vpow.pop %v665
    %v667 = vmul.f32 %v662, 1.442695
    %v668 = vpow.pop %v667
    %v669 = vmul.f32 %v663, 1.442695
    %v670 = vpow.pop %v669
    %v671 = vmul.f32 %v664, 1.442695
    %v672 = vpow.pop %v671
    %v673 = vadd.f32 %v666, 1.0
    %v674 = vadd.f32 %v668, 1.0
    %v675 = vadd.f32 %v670, 1.0
    %v676 = vadd.f32 %v672, 1.0
    %v677 = vrcp.pop %v673
    %v678 = vmul.f32 1.0, %v677
    %v679 = vrcp.pop %v674
    %v680 = vmul.f32 1.0, %v679
    %v681 = vrcp.pop %v675
    %v682 = vmul.f32 1.0, %v681
    %v683 = vrcp.pop %v676
    %v684 = vmul.f32 1.0, %v683
    %686 = vset.pattern.permute.xlu0 0
    %687 = vperm.xlu0 %686, %v678
    %v688 = vpop.permute.xlu0 %687
    %691 = vset.pattern.permute.xlu0 0
    %692 = vperm.xlu0 %691, %v680
    %v693 = vpop.permute.xlu0 %692
    %696 = vset.pattern.permute.xlu0 0
    %697 = vperm.xlu0 %696, %v682
    %v698 = vpop.permute.xlu0 %697
    %701 = vset.pattern.permute.xlu0 0
    %702 = vperm.xlu0 %701, %v684
    %v703 = vpop.permute.xlu0 %702
    %v705 = vmul.f32 %v380, %v688
    %v706 = vmul.f32 %v381, %v688
    %v707 = vmul.f32 %v382, %v693
    %v708 = vmul.f32 %v383, %v693
    %v709 = vmul.f32 %v384, %v698
    %v710 = vmul.f32 %v385, %v698
    %v711 = vmul.f32 %v386, %v703
    %v712 = vmul.f32 %v387, %v703
    %s713 = scalar_lea.vmem [#allocation5], 64
    %714 = vst [vmem:[%s713] sm:$0xff] %v705
    %715 = vst [vmem:[%s713 + $0x8] sm:$0xff] %v706
    %716 = vst [vmem:[%s713 + $0x10] sm:$0xff] %v707
    %717 = vst [vmem:[%s713 + $0x18] sm:$0xff] %v708
    %718 = vst [vmem:[%s713 + $0x20] sm:$0xff] %v709
    %719 = vst [vmem:[%s713 + $0x28] sm:$0xff] %v710
    %720 = vst [vmem:[%s713 + $0x30] sm:$0xff] %v711
    %721 = vst [vmem:[%s713 + $0x38] sm:$0xff] %v712
    // Predicated region
    $region26: #{tpu_custom_call.1} parent=1 // pred_check
      _
    $region27: #{tpu_custom_call.1} parent=1 // pred_check_branch
      %723 = sbr.rel (0) target = $region29
    $region28: #{tpu_custom_call.1} parent=1 // pred_region
      %s725 = ssub.s32 2048, 2048
      %726 = vsyncadd [#allocation4], %s725
      %s727 = sshll.u32 [#allocation5], 4
      %s728 = int_to_ptr.vmem [resolvable:$true] %s727
      %733 = dma.vmem_to_hbm [thread:$0]  %s728, 2048, %s5, [#allocation4], 256, 256, 16
    $region29: #{tpu_custom_call.1} parent=1 // pred_fallthru
      _
    // Predicated region
    $region30: #{tpu_custom_call.1} parent=1 // pred_check
      _
    $region31: #{tpu_custom_call.1} parent=1 // pred_check_branch
      %735 = sbr.rel (0) target = $region33
    $region32: #{tpu_custom_call.1} parent=1 // pred_region
      %736 = dma.done [#allocation4], 2048
    $region33: #{tpu_custom_call.1} parent=1 // pred_fallthru
      _
    %737 = vsyncpa [#allocation3], 1
    %738 = vsyncpa [#allocation4], 1

</llo_original>
